<compile_context>
chip_gen: v7x
topology: tpu7x:2x2x1
jax: 0.10.0
libtpu: 0.0.40
codegen_flags: <defaults>
</compile_context>

<pallas_src>
import jax
import jax.numpy as jnp
from jax.experimental import pallas as pl
from jax.experimental.pallas import tpu as pltpu

LANE = 128


def _round_up(n, m):
    return (n + m - 1) // m * m


def charlstm_kernel(xw_ref, h0_ref, c0_ref, whh_ref, wfc_ref, bfc_ref,
                    logits_ref, hN_ref, cN_ref):
    H = h0_ref.shape[-1]
    T = xw_ref.shape[0]

    whh = whh_ref[...]          # (H, 4H)  W_hh^T, gate columns [i, f, o, g]

    def step(t, carry):
        h, c = carry
        # xw_ref[t] already contains  x_t @ W_ih^T + b_ih + b_hh  (folded into
        # the embedding lookup in the wrapper); only the recurrent hop runs on
        # the serial critical path.
        gates = xw_ref[t] + jnp.dot(h, whh,
                                    preferred_element_type=jnp.float32)

        sig = jax.nn.sigmoid(gates[:, 0:3 * H])     # i | f | o  (one EUP pass)
        g_g = jnp.tanh(gates[:, 3 * H:4 * H])       # g
        i_g = sig[:, 0:H]
        f_g = sig[:, H:2 * H]
        o_g = sig[:, 2 * H:3 * H]

        c_new = f_g * c + i_g * g_g
        h_new = o_g * jnp.tanh(c_new)
        return h_new, c_new

    h, c = jax.lax.fori_loop(0, T, step, (h0_ref[...], c0_ref[...]),
                             unroll=min(T, 8))

    hN_ref[...] = h
    cN_ref[...] = c
    logits_ref[...] = (jnp.dot(h, wfc_ref[...],
                               preferred_element_type=jnp.float32)
                       + bfc_ref[...])


def prepare_params(params):
    """One-time weight preparation (gate permutation, projection fold, padding).

    Pure function of the weights -> do NOT redo per forward call.
    """
    H = params["embedding"].shape[1]
    V = params["w_fc_t"].shape[1]
    Vp = _round_up(V, LANE)

    # permute PyTorch gate order [i, f, g, o] -> [i, f, o, g] so only the last
    # H columns need tanh inside the kernel.
    perm = jnp.concatenate([
        jnp.arange(0, 2 * H),          # i, f
        jnp.arange(3 * H, 4 * H),      # o
        jnp.arange(2 * H, 3 * H),      # g
    ])
    w_ih_t = params["w_ih_t"][:, perm]                       # (H, 4H)
    whh = params["w_hh_t"][:, perm]                          # (H, 4H)
    bias = params["bias"][:, perm]                           # (1, 4H)

    # fold input projection + bias into the embedding lookup
    proj_table = params["embedding"] @ w_ih_t + bias         # (V_in, 4H)

    # lane-dense fc weight / bias (zero-padded columns -> exactly-zero logits)
    wfc_p = jnp.zeros((H, Vp), jnp.float32).at[:, :V].set(params["w_fc_t"])
    bfc_p = jnp.zeros((1, Vp), jnp.float32).at[:, :V].set(params["b_fc"])

    return {
        "proj_table": proj_table,
        "whh": whh,
        "wfc_p": wfc_p,
        "bfc_p": bfc_p,
        "hidden": H,
        "vocab_out": V,
    }


def charlstm_forward(x_ids, hidden, kparams):
    """Pallas equivalent of CharLSTM.forward(x, hidden).

    x_ids:   (B, T) int32 token ids
    hidden:  tuple (h0, c0) each (1, B, H)
    kparams: output of prepare_params()
    returns (logits (B, V), (h_n (1,B,H), c_n (1,B,H)))
    """
    proj_table = kparams["proj_table"]     # (V_in, 4H)  includes W_ih^T + bias
    whh = kparams["whh"]                   # (H, 4H)
    wfc_p = kparams["wfc_p"]               # (H, Vp)
    bfc_p = kparams["bfc_p"]               # (1, Vp)
    H = kparams["hidden"]
    V = kparams["vocab_out"]
    Vp = wfc_p.shape[1]

    h0, c0 = hidden
    B, T = x_ids.shape

    # glue: embedding + input projection + bias as ONE gather, time-major.
    # TODO(synk): for large T*B, move the gather in-kernel via scalar-prefetched ids.
    xw = jnp.take(proj_table, x_ids, axis=0)          # (B, T, 4H)
    xw_tm = jnp.transpose(xw, (1, 0, 2))              # (T, B, 4H)

    h0_2d = h0.reshape(B, H)
    c0_2d = c0.reshape(B, H)

    vmem = pl.BlockSpec(memory_space=pltpu.MemorySpace.VMEM)

    logits_p, h_n, c_n = pl.pallas_call(
        charlstm_kernel,
        out_shape=(
            jax.ShapeDtypeStruct((B, Vp), jnp.float32),
            jax.ShapeDtypeStruct((B, H), jnp.float32),
            jax.ShapeDtypeStruct((B, H), jnp.float32),
        ),
        in_specs=[vmem] * 6,
        out_specs=(vmem, vmem, vmem),
    )(xw_tm, h0_2d, c0_2d, whh, wfc_p, bfc_p)

    logits = logits_p[:, :V]
    return logits, (h_n.reshape(1, B, H), c_n.reshape(1, B, H))


def init_params(key, vocab_size, hidden_size):
    """Raw parameters in PyTorch nn.LSTM convention (gate order i, f, g, o)."""
    ks = jax.random.split(key, 6)
    s = 1.0 / jnp.sqrt(hidden_size)
    emb = jax.random.normal(ks[0], (vocab_size, hidden_size), jnp.float32)
    w_ih = jax.random.uniform(ks[1], (4 * hidden_size, hidden_size),
                              jnp.float32, -s, s)
    w_hh = jax.random.uniform(ks[2], (4 * hidden_size, hidden_size),
                              jnp.float32, -s, s)
    b_ih = jax.random.uniform(ks[3], (4 * hidden_size,), jnp.float32, -s, s)
    b_hh = jax.random.uniform(ks[4], (4 * hidden_size,), jnp.float32, -s, s)
    w_fc = jax.random.uniform(ks[5], (vocab_size, hidden_size),
                              jnp.float32, -s, s)
    b_fc = jnp.zeros((vocab_size,), jnp.float32)
    return {
        "embedding": emb,
        "w_ih_t": w_ih.T,                       # (H, 4H)
        "w_hh_t": w_hh.T,                       # (H, 4H)
        "bias": (b_ih + b_hh).reshape(1, -1),   # (1, 4H)
        "w_fc_t": w_fc.T,                       # (H, V)
        "b_fc": b_fc.reshape(1, -1),            # (1, V)
    }


def reference_forward(x_ids, hidden, params):
    """Pure-JAX reference mirroring torch.nn.LSTM semantics (gate order i,f,g,o)."""
    emb = jnp.take(params["embedding"], x_ids, axis=0)   # (B, T, H)
    h, c = hidden[0][0], hidden[1][0]                    # (B, H)
    H = h.shape[-1]
    T = emb.shape[1]
    for t in range(T):
        x = emb[:, t, :]
        gates = x @ params["w_ih_t"] + h @ params["w_hh_t"] + params["bias"]
        i_g = jax.nn.sigmoid(gates[:, 0:H])
        f_g = jax.nn.sigmoid(gates[:, H:2 * H])
        g_g = jnp.tanh(gates[:, 2 * H:3 * H])
        o_g = jax.nn.sigmoid(gates[:, 3 * H:4 * H])
        c = f_g * c + i_g * g_g
        h = o_g * jnp.tanh(c)
    logits = h @ params["w_fc_t"] + params["b_fc"]
    return logits, (h[None], c[None])


if __name__ == "__main__":
    B, T, H, V = 8, 8, 32, 65   # batch, seq, hidden_size, vocab (char set size)

    key = jax.random.PRNGKey(0)
    k_par, k_x = jax.random.split(key)
    params = init_params(k_par, V, H)
    kparams = prepare_params(params)            # one-time weight prep

    x_ids = jax.random.randint(k_x, (B, T), 0, V, dtype=jnp.int32)
    hidden0 = (jnp.zeros((1, B, H), jnp.float32),
               jnp.zeros((1, B, H), jnp.float32))       # init_hidden

    logits, (h_n, c_n) = charlstm_forward(x_ids, hidden0, kparams)
    jax.block_until_ready((logits, h_n, c_n))

    ref_logits, (ref_h, ref_c) = reference_forward(x_ids, hidden0, params)
    assert jnp.allclose(logits, ref_logits, atol=1e-4, rtol=1e-4)
    assert jnp.allclose(h_n, ref_h, atol=1e-5, rtol=1e-5)
    assert jnp.allclose(c_n, ref_c, atol=1e-5, rtol=1e-5)

    print("KERNEL_OK")
</pallas_src>

<mosaic_0001>
module attributes {stable_mosaic.version = 11 : i64} {
  func.func @charlstm_kernel(%arg0: memref<8x8x128xf32, #tpu.memory_space<vmem>>, %arg1: memref<8x32xf32, #tpu.memory_space<vmem>>, %arg2: memref<8x32xf32, #tpu.memory_space<vmem>>, %arg3: memref<32x128xf32, #tpu.memory_space<vmem>>, %arg4: memref<32x128xf32, #tpu.memory_space<vmem>>, %arg5: memref<1x128xf32, #tpu.memory_space<vmem>>, %arg6: memref<8x128xf32, #tpu.memory_space<vmem>>, %arg7: memref<8x32xf32, #tpu.memory_space<vmem>>, %arg8: memref<8x32xf32, #tpu.memory_space<vmem>>) attributes {dimension_semantics = [], scalar_prefetch = 0 : i64, scratch_operands = 0 : i64, tpu.core_type = #tpu.core_type<tc>} {
    %c0 = arith.constant 0 : index
    %c0_0 = arith.constant 0 : index
    %0 = vector.load %arg3[%c0, %c0_0] : memref<32x128xf32, #tpu.memory_space<vmem>>, vector<32x128xf32>
    %c0_1 = arith.constant 0 : index
    %c0_2 = arith.constant 0 : index
    %1 = vector.load %arg1[%c0_1, %c0_2] : memref<8x32xf32, #tpu.memory_space<vmem>>, vector<8x32xf32>
    %c0_3 = arith.constant 0 : index
    %c0_4 = arith.constant 0 : index
    %2 = vector.load %arg2[%c0_3, %c0_4] : memref<8x32xf32, #tpu.memory_space<vmem>>, vector<8x32xf32>
    %c0_i32 = arith.constant 0 : i32
    %3 = arith.index_cast %c0_i32 : i32 to index
    %c0_5 = arith.constant 0 : index
    %c0_6 = arith.constant 0 : index
    %4 = vector.load %arg0[%3, %c0_5, %c0_6] : memref<8x8x128xf32, #tpu.memory_space<vmem>>, vector<1x8x128xf32>
    %5 = vector.shape_cast %4 : vector<1x8x128xf32> to vector<8x128xf32>
    %cst = arith.constant dense<0.000000e+00> : vector<8x128xf32>
    %6 = tpu.matmul %1, %0, %cst {dimension_numbers = #tpu.dot_dimension_numbers<[1], [0], [0], [1], [0, 0, 1, 1], [], []>} : vector<8x32xf32>, vector<32x128xf32>, vector<8x128xf32> -> vector<8x128xf32>
    %7 = arith.addf %5, %6 : vector<8x128xf32>
    %8 = vector.extract_strided_slice %7 {offsets = [0, 0], sizes = [8, 96], strides = [1, 1]} : vector<8x128xf32> to vector<8x96xf32>
    %9 = arith.negf %8 : vector<8x96xf32>
    %10 = math.exp %9 : vector<8x96xf32>
    %cst_7 = arith.constant 1.000000e+00 : f32
    %11 = vector.broadcast %cst_7 : f32 to vector<8x96xf32>
    %12 = arith.addf %11, %10 : vector<8x96xf32>
    %13 = arith.divf %11, %12 : vector<8x96xf32>
    %14 = vector.extract_strided_slice %7 {offsets = [0, 96], sizes = [8, 32], strides = [1, 1]} : vector<8x128xf32> to vector<8x32xf32>
    %15 = math.tanh %14 : vector<8x32xf32>
    %16 = vector.extract_strided_slice %13 {offsets = [0, 0], sizes = [8, 32], strides = [1, 1]} : vector<8x96xf32> to vector<8x32xf32>
    %17 = vector.extract_strided_slice %13 {offsets = [0, 32], sizes = [8, 32], strides = [1, 1]} : vector<8x96xf32> to vector<8x32xf32>
    %18 = vector.extract_strided_slice %13 {offsets = [0, 64], sizes = [8, 32], strides = [1, 1]} : vector<8x96xf32> to vector<8x32xf32>
    %19 = arith.mulf %17, %2 : vector<8x32xf32>
    %20 = arith.mulf %16, %15 : vector<8x32xf32>
    %21 = arith.addf %19, %20 : vector<8x32xf32>
    %22 = math.tanh %21 : vector<8x32xf32>
    %23 = arith.mulf %18, %22 : vector<8x32xf32>
    %c1_i32 = arith.constant 1 : i32
    %24 = arith.index_cast %c1_i32 : i32 to index
    %c0_8 = arith.constant 0 : index
    %c0_9 = arith.constant 0 : index
    %25 = vector.load %arg0[%24, %c0_8, %c0_9] : memref<8x8x128xf32, #tpu.memory_space<vmem>>, vector<1x8x128xf32>
    %26 = vector.shape_cast %25 : vector<1x8x128xf32> to vector<8x128xf32>
    %cst_10 = arith.constant dense<0.000000e+00> : vector<8x128xf32>
    %27 = tpu.matmul %23, %0, %cst_10 {dimension_numbers = #tpu.dot_dimension_numbers<[1], [0], [0], [1], [0, 0, 1, 1], [], []>} : vector<8x32xf32>, vector<32x128xf32>, vector<8x128xf32> -> vector<8x128xf32>
    %28 = arith.addf %26, %27 : vector<8x128xf32>
    %29 = vector.extract_strided_slice %28 {offsets = [0, 0], sizes = [8, 96], strides = [1, 1]} : vector<8x128xf32> to vector<8x96xf32>
    %30 = arith.negf %29 : vector<8x96xf32>
    %31 = math.exp %30 : vector<8x96xf32>
    %cst_11 = arith.constant 1.000000e+00 : f32
    %32 = vector.broadcast %cst_11 : f32 to vector<8x96xf32>
    %33 = arith.addf %32, %31 : vector<8x96xf32>
    %34 = arith.divf %32, %33 : vector<8x96xf32>
    %35 = vector.extract_strided_slice %28 {offsets = [0, 96], sizes = [8, 32], strides = [1, 1]} : vector<8x128xf32> to vector<8x32xf32>
    %36 = math.tanh %35 : vector<8x32xf32>
    %37 = vector.extract_strided_slice %34 {offsets = [0, 0], sizes = [8, 32], strides = [1, 1]} : vector<8x96xf32> to vector<8x32xf32>
    %38 = vector.extract_strided_slice %34 {offsets = [0, 32], sizes = [8, 32], strides = [1, 1]} : vector<8x96xf32> to vector<8x32xf32>
    %39 = vector.extract_strided_slice %34 {offsets = [0, 64], sizes = [8, 32], strides = [1, 1]} : vector<8x96xf32> to vector<8x32xf32>
    %40 = arith.mulf %38, %21 : vector<8x32xf32>
    %41 = arith.mulf %37, %36 : vector<8x32xf32>
    %42 = arith.addf %40, %41 : vector<8x32xf32>
    %43 = math.tanh %42 : vector<8x32xf32>
    %44 = arith.mulf %39, %43 : vector<8x32xf32>
    %c2_i32 = arith.constant 2 : i32
    %45 = arith.index_cast %c2_i32 : i32 to index
    %c0_12 = arith.constant 0 : index
    %c0_13 = arith.constant 0 : index
    %46 = vector.load %arg0[%45, %c0_12, %c0_13] : memref<8x8x128xf32, #tpu.memory_space<vmem>>, vector<1x8x128xf32>
    %47 = vector.shape_cast %46 : vector<1x8x128xf32> to vector<8x128xf32>
    %cst_14 = arith.constant dense<0.000000e+00> : vector<8x128xf32>
    %48 = tpu.matmul %44, %0, %cst_14 {dimension_numbers = #tpu.dot_dimension_numbers<[1], [0], [0], [1], [0, 0, 1, 1], [], []>} : vector<8x32xf32>, vector<32x128xf32>, vector<8x128xf32> -> vector<8x128xf32>
    %49 = arith.addf %47, %48 : vector<8x128xf32>
    %50 = vector.extract_strided_slice %49 {offsets = [0, 0], sizes = [8, 96], strides = [1, 1]} : vector<8x128xf32> to vector<8x96xf32>
    %51 = arith.negf %50 : vector<8x96xf32>
    %52 = math.exp %51 : vector<8x96xf32>
    %cst_15 = arith.constant 1.000000e+00 : f32
    %53 = vector.broadcast %cst_15 : f32 to vector<8x96xf32>
    %54 = arith.addf %53, %52 : vector<8x96xf32>
    %55 = arith.divf %53, %54 : vector<8x96xf32>
    %56 = vector.extract_strided_slice %49 {offsets = [0, 96], sizes = [8, 32], strides = [1, 1]} : vector<8x128xf32> to vector<8x32xf32>
    %57 = math.tanh %56 : vector<8x32xf32>
    %58 = vector.extract_strided_slice %55 {offsets = [0, 0], sizes = [8, 32], strides = [1, 1]} : vector<8x96xf32> to vector<8x32xf32>
    %59 = vector.extract_strided_slice %55 {offsets = [0, 32], sizes = [8, 32], strides = [1, 1]} : vector<8x96xf32> to vector<8x32xf32>
    %60 = vector.extract_strided_slice %55 {offsets = [0, 64], sizes = [8, 32], strides = [1, 1]} : vector<8x96xf32> to vector<8x32xf32>
    %61 = arith.mulf %59, %42 : vector<8x32xf32>
    %62 = arith.mulf %58, %57 : vector<8x32xf32>
    %63 = arith.addf %61, %62 : vector<8x32xf32>
    %64 = math.tanh %63 : vector<8x32xf32>
    %65 = arith.mulf %60, %64 : vector<8x32xf32>
    %c3_i32 = arith.constant 3 : i32
    %66 = arith.index_cast %c3_i32 : i32 to index
    %c0_16 = arith.constant 0 : index
    %c0_17 = arith.constant 0 : index
    %67 = vector.load %arg0[%66, %c0_16, %c0_17] : memref<8x8x128xf32, #tpu.memory_space<vmem>>, vector<1x8x128xf32>
    %68 = vector.shape_cast %67 : vector<1x8x128xf32> to vector<8x128xf32>
    %cst_18 = arith.constant dense<0.000000e+00> : vector<8x128xf32>
    %69 = tpu.matmul %65, %0, %cst_18 {dimension_numbers = #tpu.dot_dimension_numbers<[1], [0], [0], [1], [0, 0, 1, 1], [], []>} : vector<8x32xf32>, vector<32x128xf32>, vector<8x128xf32> -> vector<8x128xf32>
    %70 = arith.addf %68, %69 : vector<8x128xf32>
    %71 = vector.extract_strided_slice %70 {offsets = [0, 0], sizes = [8, 96], strides = [1, 1]} : vector<8x128xf32> to vector<8x96xf32>
    %72 = arith.negf %71 : vector<8x96xf32>
    %73 = math.exp %72 : vector<8x96xf32>
    %cst_19 = arith.constant 1.000000e+00 : f32
    %74 = vector.broadcast %cst_19 : f32 to vector<8x96xf32>
    %75 = arith.addf %74, %73 : vector<8x96xf32>
    %76 = arith.divf %74, %75 : vector<8x96xf32>
    %77 = vector.extract_strided_slice %70 {offsets = [0, 96], sizes = [8, 32], strides = [1, 1]} : vector<8x128xf32> to vector<8x32xf32>
    %78 = math.tanh %77 : vector<8x32xf32>
    %79 = vector.extract_strided_slice %76 {offsets = [0, 0], sizes = [8, 32], strides = [1, 1]} : vector<8x96xf32> to vector<8x32xf32>
    %80 = vector.extract_strided_slice %76 {offsets = [0, 32], sizes = [8, 32], strides = [1, 1]} : vector<8x96xf32> to vector<8x32xf32>
    %81 = vector.extract_strided_slice %76 {offsets = [0, 64], sizes = [8, 32], strides = [1, 1]} : vector<8x96xf32> to vector<8x32xf32>
    %82 = arith.mulf %80, %63 : vector<8x32xf32>
    %83 = arith.mulf %79, %78 : vector<8x32xf32>
    %84 = arith.addf %82, %83 : vector<8x32xf32>
    %85 = math.tanh %84 : vector<8x32xf32>
    %86 = arith.mulf %81, %85 : vector<8x32xf32>
    %c4_i32 = arith.constant 4 : i32
    %87 = arith.index_cast %c4_i32 : i32 to index
    %c0_20 = arith.constant 0 : index
    %c0_21 = arith.constant 0 : index
    %88 = vector.load %arg0[%87, %c0_20, %c0_21] : memref<8x8x128xf32, #tpu.memory_space<vmem>>, vector<1x8x128xf32>
    %89 = vector.shape_cast %88 : vector<1x8x128xf32> to vector<8x128xf32>
    %cst_22 = arith.constant dense<0.000000e+00> : vector<8x128xf32>
    %90 = tpu.matmul %86, %0, %cst_22 {dimension_numbers = #tpu.dot_dimension_numbers<[1], [0], [0], [1], [0, 0, 1, 1], [], []>} : vector<8x32xf32>, vector<32x128xf32>, vector<8x128xf32> -> vector<8x128xf32>
    %91 = arith.addf %89, %90 : vector<8x128xf32>
    %92 = vector.extract_strided_slice %91 {offsets = [0, 0], sizes = [8, 96], strides = [1, 1]} : vector<8x128xf32> to vector<8x96xf32>
    %93 = arith.negf %92 : vector<8x96xf32>
    %94 = math.exp %93 : vector<8x96xf32>
    %cst_23 = arith.constant 1.000000e+00 : f32
    %95 = vector.broadcast %cst_23 : f32 to vector<8x96xf32>
    %96 = arith.addf %95, %94 : vector<8x96xf32>
    %97 = arith.divf %95, %96 : vector<8x96xf32>
    %98 = vector.extract_strided_slice %91 {offsets = [0, 96], sizes = [8, 32], strides = [1, 1]} : vector<8x128xf32> to vector<8x32xf32>
    %99 = math.tanh %98 : vector<8x32xf32>
    %100 = vector.extract_strided_slice %97 {offsets = [0, 0], sizes = [8, 32], strides = [1, 1]} : vector<8x96xf32> to vector<8x32xf32>
    %101 = vector.extract_strided_slice %97 {offsets = [0, 32], sizes = [8, 32], strides = [1, 1]} : vector<8x96xf32> to vector<8x32xf32>
    %102 = vector.extract_strided_slice %97 {offsets = [0, 64], sizes = [8, 32], strides = [1, 1]} : vector<8x96xf32> to vector<8x32xf32>
    %103 = arith.mulf %101, %84 : vector<8x32xf32>
    %104 = arith.mulf %100, %99 : vector<8x32xf32>
    %105 = arith.addf %103, %104 : vector<8x32xf32>
    %106 = math.tanh %105 : vector<8x32xf32>
    %107 = arith.mulf %102, %106 : vector<8x32xf32>
    %c5_i32 = arith.constant 5 : i32
    %108 = arith.index_cast %c5_i32 : i32 to index
    %c0_24 = arith.constant 0 : index
    %c0_25 = arith.constant 0 : index
    %109 = vector.load %arg0[%108, %c0_24, %c0_25] : memref<8x8x128xf32, #tpu.memory_space<vmem>>, vector<1x8x128xf32>
    %110 = vector.shape_cast %109 : vector<1x8x128xf32> to vector<8x128xf32>
    %cst_26 = arith.constant dense<0.000000e+00> : vector<8x128xf32>
    %111 = tpu.matmul %107, %0, %cst_26 {dimension_numbers = #tpu.dot_dimension_numbers<[1], [0], [0], [1], [0, 0, 1, 1], [], []>} : vector<8x32xf32>, vector<32x128xf32>, vector<8x128xf32> -> vector<8x128xf32>
    %112 = arith.addf %110, %111 : vector<8x128xf32>
    %113 = vector.extract_strided_slice %112 {offsets = [0, 0], sizes = [8, 96], strides = [1, 1]} : vector<8x128xf32> to vector<8x96xf32>
    %114 = arith.negf %113 : vector<8x96xf32>
    %115 = math.exp %114 : vector<8x96xf32>
    %cst_27 = arith.constant 1.000000e+00 : f32
    %116 = vector.broadcast %cst_27 : f32 to vector<8x96xf32>
    %117 = arith.addf %116, %115 : vector<8x96xf32>
    %118 = arith.divf %116, %117 : vector<8x96xf32>
    %119 = vector.extract_strided_slice %112 {offsets = [0, 96], sizes = [8, 32], strides = [1, 1]} : vector<8x128xf32> to vector<8x32xf32>
    %120 = math.tanh %119 : vector<8x32xf32>
    %121 = vector.extract_strided_slice %118 {offsets = [0, 0], sizes = [8, 32], strides = [1, 1]} : vector<8x96xf32> to vector<8x32xf32>
    %122 = vector.extract_strided_slice %118 {offsets = [0, 32], sizes = [8, 32], strides = [1, 1]} : vector<8x96xf32> to vector<8x32xf32>
    %123 = vector.extract_strided_slice %118 {offsets = [0, 64], sizes = [8, 32], strides = [1, 1]} : vector<8x96xf32> to vector<8x32xf32>
    %124 = arith.mulf %122, %105 : vector<8x32xf32>
    %125 = arith.mulf %121, %120 : vector<8x32xf32>
    %126 = arith.addf %124, %125 : vector<8x32xf32>
    %127 = math.tanh %126 : vector<8x32xf32>
    %128 = arith.mulf %123, %127 : vector<8x32xf32>
    %c6_i32 = arith.constant 6 : i32
    %129 = arith.index_cast %c6_i32 : i32 to index
    %c0_28 = arith.constant 0 : index
    %c0_29 = arith.constant 0 : index
    %130 = vector.load %arg0[%129, %c0_28, %c0_29] : memref<8x8x128xf32, #tpu.memory_space<vmem>>, vector<1x8x128xf32>
    %131 = vector.shape_cast %130 : vector<1x8x128xf32> to vector<8x128xf32>
    %cst_30 = arith.constant dense<0.000000e+00> : vector<8x128xf32>
    %132 = tpu.matmul %128, %0, %cst_30 {dimension_numbers = #tpu.dot_dimension_numbers<[1], [0], [0], [1], [0, 0, 1, 1], [], []>} : vector<8x32xf32>, vector<32x128xf32>, vector<8x128xf32> -> vector<8x128xf32>
    %133 = arith.addf %131, %132 : vector<8x128xf32>
    %134 = vector.extract_strided_slice %133 {offsets = [0, 0], sizes = [8, 96], strides = [1, 1]} : vector<8x128xf32> to vector<8x96xf32>
    %135 = arith.negf %134 : vector<8x96xf32>
    %136 = math.exp %135 : vector<8x96xf32>
    %cst_31 = arith.constant 1.000000e+00 : f32
    %137 = vector.broadcast %cst_31 : f32 to vector<8x96xf32>
    %138 = arith.addf %137, %136 : vector<8x96xf32>
    %139 = arith.divf %137, %138 : vector<8x96xf32>
    %140 = vector.extract_strided_slice %133 {offsets = [0, 96], sizes = [8, 32], strides = [1, 1]} : vector<8x128xf32> to vector<8x32xf32>
    %141 = math.tanh %140 : vector<8x32xf32>
    %142 = vector.extract_strided_slice %139 {offsets = [0, 0], sizes = [8, 32], strides = [1, 1]} : vector<8x96xf32> to vector<8x32xf32>
    %143 = vector.extract_strided_slice %139 {offsets = [0, 32], sizes = [8, 32], strides = [1, 1]} : vector<8x96xf32> to vector<8x32xf32>
    %144 = vector.extract_strided_slice %139 {offsets = [0, 64], sizes = [8, 32], strides = [1, 1]} : vector<8x96xf32> to vector<8x32xf32>
    %145 = arith.mulf %143, %126 : vector<8x32xf32>
    %146 = arith.mulf %142, %141 : vector<8x32xf32>
    %147 = arith.addf %145, %146 : vector<8x32xf32>
    %148 = math.tanh %147 : vector<8x32xf32>
    %149 = arith.mulf %144, %148 : vector<8x32xf32>
    %c7_i32 = arith.constant 7 : i32
    %150 = arith.index_cast %c7_i32 : i32 to index
    %c0_32 = arith.constant 0 : index
    %c0_33 = arith.constant 0 : index
    %151 = vector.load %arg0[%150, %c0_32, %c0_33] : memref<8x8x128xf32, #tpu.memory_space<vmem>>, vector<1x8x128xf32>
    %152 = vector.shape_cast %151 : vector<1x8x128xf32> to vector<8x128xf32>
    %cst_34 = arith.constant dense<0.000000e+00> : vector<8x128xf32>
    %153 = tpu.matmul %149, %0, %cst_34 {dimension_numbers = #tpu.dot_dimension_numbers<[1], [0], [0], [1], [0, 0, 1, 1], [], []>} : vector<8x32xf32>, vector<32x128xf32>, vector<8x128xf32> -> vector<8x128xf32>
    %154 = arith.addf %152, %153 : vector<8x128xf32>
    %155 = vector.extract_strided_slice %154 {offsets = [0, 0], sizes = [8, 96], strides = [1, 1]} : vector<8x128xf32> to vector<8x96xf32>
    %156 = arith.negf %155 : vector<8x96xf32>
    %157 = math.exp %156 : vector<8x96xf32>
    %cst_35 = arith.constant 1.000000e+00 : f32
    %158 = vector.broadcast %cst_35 : f32 to vector<8x96xf32>
    %159 = arith.addf %158, %157 : vector<8x96xf32>
    %160 = arith.divf %158, %159 : vector<8x96xf32>
    %161 = vector.extract_strided_slice %154 {offsets = [0, 96], sizes = [8, 32], strides = [1, 1]} : vector<8x128xf32> to vector<8x32xf32>
    %162 = math.tanh %161 : vector<8x32xf32>
    %163 = vector.extract_strided_slice %160 {offsets = [0, 0], sizes = [8, 32], strides = [1, 1]} : vector<8x96xf32> to vector<8x32xf32>
    %164 = vector.extract_strided_slice %160 {offsets = [0, 32], sizes = [8, 32], strides = [1, 1]} : vector<8x96xf32> to vector<8x32xf32>
    %165 = vector.extract_strided_slice %160 {offsets = [0, 64], sizes = [8, 32], strides = [1, 1]} : vector<8x96xf32> to vector<8x32xf32>
    %166 = arith.mulf %164, %147 : vector<8x32xf32>
    %167 = arith.mulf %163, %162 : vector<8x32xf32>
    %168 = arith.addf %166, %167 : vector<8x32xf32>
    %169 = math.tanh %168 : vector<8x32xf32>
    %170 = arith.mulf %165, %169 : vector<8x32xf32>
    %c8_i32 = arith.constant 8 : i32
    %c0_36 = arith.constant 0 : index
    %c0_37 = arith.constant 0 : index
    %171 = vector.load %arg7[%c0_36, %c0_37] : memref<8x32xf32, #tpu.memory_space<vmem>>, vector<8x32xf32>
    tpu.vector_store %arg7[%c0_36, %c0_37], %170 {strides = array<i32>} : memref<8x32xf32, #tpu.memory_space<vmem>>, vector<8x32xf32>,
    %c0_38 = arith.constant 0 : index
    %c0_39 = arith.constant 0 : index
    %172 = vector.load %arg8[%c0_38, %c0_39] : memref<8x32xf32, #tpu.memory_space<vmem>>, vector<8x32xf32>
    tpu.vector_store %arg8[%c0_38, %c0_39], %168 {strides = array<i32>} : memref<8x32xf32, #tpu.memory_space<vmem>>, vector<8x32xf32>,
    %c0_40 = arith.constant 0 : index
    %c0_41 = arith.constant 0 : index
    %173 = vector.load %arg4[%c0_40, %c0_41] : memref<32x128xf32, #tpu.memory_space<vmem>>, vector<32x128xf32>
    %cst_42 = arith.constant dense<0.000000e+00> : vector<8x128xf32>
    %174 = tpu.matmul %170, %173, %cst_42 {dimension_numbers = #tpu.dot_dimension_numbers<[1], [0], [0], [1], [0, 0, 1, 1], [], []>} : vector<8x32xf32>, vector<32x128xf32>, vector<8x128xf32> -> vector<8x128xf32>
    %c0_43 = arith.constant 0 : index
    %c0_44 = arith.constant 0 : index
    %175 = vector.load %arg5[%c0_43, %c0_44] : memref<1x128xf32, #tpu.memory_space<vmem>>, vector<1x128xf32>
    %176 = vector.broadcast %175 : vector<1x128xf32> to vector<8x128xf32>
    %177 = arith.addf %174, %176 : vector<8x128xf32>
    %c0_45 = arith.constant 0 : index
    %c0_46 = arith.constant 0 : index
    %178 = vector.load %arg6[%c0_45, %c0_46] : memref<8x128xf32, #tpu.memory_space<vmem>>, vector<8x128xf32>
    tpu.vector_store %arg6[%c0_45, %c0_46], %177 {strides = array<i32>} : memref<8x128xf32, #tpu.memory_space<vmem>>, vector<8x128xf32>,
    return
  }
}

</mosaic_0001>

<llo_original>
// kernel: tpu_custom_call.1
$region0: #{tpu_custom_call.1}
  #allocation0 [shape = 'u32[]', space=smem, size = 0x4, offset = 0x4, fixed_abs, tag = 'smem constant byte address 0x4 - core index']
  #allocation1 [shape = 'u32[144,128]{1,0:T(1,128)}', space=vmem, size = 0x12000, scoped, tag = 'internal scratch']
  %s0 = inlined_call_operand.hbm [shape: f32[8,8,128], index: 0, kind: input, shape index: {}]
  %s1 = inlined_call_operand.hbm [shape: f32[8,32], index: 1, kind: input, shape index: {}]
  %s2 = inlined_call_operand.hbm [shape: f32[8,32], index: 2, kind: input, shape index: {}]
  %s3 = inlined_call_operand.hbm [shape: f32[32,128], index: 3, kind: input, shape index: {}]
  %s4 = inlined_call_operand.hbm [shape: f32[32,128], index: 4, kind: input, shape index: {}]
  %s5 = inlined_call_operand.vmem [shape: f32[1,128], index: 5, kind: input, shape index: {}]
  %s6 = inlined_call_operand.hbm [shape: f32[8,128], index: 6, kind: output, shape index: {0}]
  %s7 = inlined_call_operand.hbm [shape: f32[8,32], index: 7, kind: output, shape index: {1}]
  %s8 = inlined_call_operand.hbm [shape: f32[8,32], index: 8, kind: output, shape index: {2}]
  %9 = xla_tuple %s6, %s7, %s8
  %s10 = sld [smem:[#allocation0]]
  $region70: #{tpu_custom_call.1} parent=0
    _
  %s12 = ssub.s32 1, %s10
  %s13 = scalar_select 0, %s12, %s10
  $region1: #{tpu_custom_call.1} parent=0
    #allocation2 [shape = 'u8[32768]{0}', space=vmem, size = 0x8000, scoped, tag = 'input window, operand 0, single buffered']
    #allocation3 [shape = 's32[1]{0}', space=sflag, size = 0x4, scoped, tag = 'scoped memory for tpu_custom_call.1']
    #allocation4 [shape = 's32[1]{0}', space=sflag, size = 0x4, scoped, tag = 'scoped memory for tpu_custom_call.1']
    #allocation5 [shape = 'u8[4096]{0}', space=vmem, size = 0x1000, scoped, tag = 'input window, operand 1, single buffered']
    #allocation6 [shape = 's32[1]{0}', space=sflag, size = 0x4, scoped, tag = 'scoped memory for tpu_custom_call.1']
    #allocation7 [shape = 'u8[4096]{0}', space=vmem, size = 0x1000, scoped, tag = 'input window, operand 2, single buffered']
    #allocation8 [shape = 'u8[16384]{0}', space=vmem, size = 0x4000, scoped, tag = 'input window, operand 3, single buffered']
    #allocation9 [shape = 's32[1]{0}', space=sflag, size = 0x4, scoped, tag = 'scoped memory for tpu_custom_call.1']
    #allocation10 [shape = 'u8[16384]{0}', space=vmem, size = 0x4000, scoped, tag = 'input window, operand 4, single buffered']
    #allocation11 [shape = 'u8[4096]{0}', space=vmem, size = 0x1000, scoped, tag = 'output window, operand 0, single buffered']
    #allocation12 [shape = 'u8[4096]{0}', space=vmem, size = 0x1000, scoped, tag = 'output window, operand 1, single buffered']
    #allocation13 [shape = 's32[1]{0}', space=sflag, size = 0x4, scoped, tag = 'scoped memory for tpu_custom_call.1']
    #allocation14 [shape = 'u8[4096]{0}', space=vmem, size = 0x1000, scoped, tag = 'output window, operand 2, single buffered']
    %14 = vsyncpa [#allocation3], 0
    %15 = vsyncpa [#allocation6], 0
    %16 = vsyncpa [#allocation9], 0
    %17 = vsyncpa [#allocation4], 0
    %18 = vsyncpa [#allocation13], 0
    // Predicated region
    $region2: #{tpu_custom_call.1} parent=1 // pred_check
      _
    $region3: #{tpu_custom_call.1} parent=1 // pred_check_branch
      %20 = sbr.rel (0) target = $region5
    $region4: #{tpu_custom_call.1} parent=1 // pred_region
      %s22 = ssub.s32 1024, 1024
      %23 = vsyncadd [#allocation3], %s22
      %s24 = sshll.u32 [#allocation2], 4
      %s25 = int_to_ptr.vmem [resolvable:$true] %s24
      %30 = dma.hbm_to_vmem [thread:$0]  %s0, 1024, %s25, [#allocation3], 128, 128, 8
    $region5: #{tpu_custom_call.1} parent=1 // pred_fallthru
      _
    // Predicated region
    $region6: #{tpu_custom_call.1} parent=1 // pred_check
      _
    $region7: #{tpu_custom_call.1} parent=1 // pred_check_branch
      %32 = sbr.rel (0) target = $region9
    $region8: #{tpu_custom_call.1} parent=1 // pred_region
      %s34 = ssub.s32 128, 128
      %35 = vsyncadd [#allocation6], %s34
      %s37 = sshll.u32 [#allocation5], 4
      %s38 = int_to_ptr.vmem [resolvable:$true] %s37
      %40 = dma.hbm_to_vmem [thread:$0]  %s1, 128, %s38, [#allocation6]
    $region9: #{tpu_custom_call.1} parent=1 // pred_fallthru
      _
    // Predicated region
    $region10: #{tpu_custom_call.1} parent=1 // pred_check
      _
    $region11: #{tpu_custom_call.1} parent=1 // pred_check_branch
      %42 = sbr.rel (0) target = $region13
    $region12: #{tpu_custom_call.1} parent=1 // pred_region
      %s44 = ssub.s32 128, 128
      %45 = vsyncadd [#allocation6], %s44
      %s47 = sshll.u32 [#allocation7], 4
      %s48 = int_to_ptr.vmem [resolvable:$true] %s47
      %50 = dma.hbm_to_vmem [thread:$0]  %s2, 128, %s48, [#allocation6]
    $region13: #{tpu_custom_call.1} parent=1 // pred_fallthru
      _
    // Predicated region
    $region14: #{tpu_custom_call.1} parent=1 // pred_check
      _
    $region15: #{tpu_custom_call.1} parent=1 // pred_check_branch
      %52 = sbr.rel (0) target = $region17
    $region16: #{tpu_custom_call.1} parent=1 // pred_region
      %s54 = ssub.s32 512, 512
      %55 = vsyncadd [#allocation9], %s54
      %s56 = sshll.u32 [#allocation8], 4
      %s57 = int_to_ptr.vmem [resolvable:$true] %s56
      %62 = dma.hbm_to_vmem [thread:$0]  %s3, 512, %s57, [#allocation9], 128, 128, 8
    $region17: #{tpu_custom_call.1} parent=1 // pred_fallthru
      _
    // Predicated region
    $region18: #{tpu_custom_call.1} parent=1 // pred_check
      _
    $region19: #{tpu_custom_call.1} parent=1 // pred_check_branch
      %64 = sbr.rel (0) target = $region21
    $region20: #{tpu_custom_call.1} parent=1 // pred_region
      %s66 = ssub.s32 512, 512
      %67 = vsyncadd [#allocation9], %s66
      %s68 = sshll.u32 [#allocation10], 4
      %s69 = int_to_ptr.vmem [resolvable:$true] %s68
      %74 = dma.hbm_to_vmem [thread:$0]  %s4, 512, %s69, [#allocation9], 128, 128, 8
    $region21: #{tpu_custom_call.1} parent=1 // pred_fallthru
      _
    // Predicated region
    $region22: #{tpu_custom_call.1} parent=1 // pred_check
      _
    $region23: #{tpu_custom_call.1} parent=1 // pred_check_branch
      %76 = sbr.rel (0) target = $region25
    $region24: #{tpu_custom_call.1} parent=1 // pred_region
      _
    $region25: #{tpu_custom_call.1} parent=1 // pred_fallthru
      _
    // Predicated region
    $region26: #{tpu_custom_call.1} parent=1 // pred_check
      _
    $region27: #{tpu_custom_call.1} parent=1 // pred_check_branch
      %78 = sbr.rel (0) target = $region29
    $region28: #{tpu_custom_call.1} parent=1 // pred_region
      %79 = dma.done [#allocation3], 1024
    $region29: #{tpu_custom_call.1} parent=1 // pred_fallthru
      _
    // Predicated region
    $region30: #{tpu_custom_call.1} parent=1 // pred_check
      _
    $region31: #{tpu_custom_call.1} parent=1 // pred_check_branch
      %81 = sbr.rel (0) target = $region33
    $region32: #{tpu_custom_call.1} parent=1 // pred_region
      %82 = dma.done [#allocation6], 128
    $region33: #{tpu_custom_call.1} parent=1 // pred_fallthru
      _
    // Predicated region
    $region34: #{tpu_custom_call.1} parent=1 // pred_check
      _
    $region35: #{tpu_custom_call.1} parent=1 // pred_check_branch
      %84 = sbr.rel (0) target = $region37
    $region36: #{tpu_custom_call.1} parent=1 // pred_region
      %85 = dma.done [#allocation6], 128
    $region37: #{tpu_custom_call.1} parent=1 // pred_fallthru
      _
    // Predicated region
    $region38: #{tpu_custom_call.1} parent=1 // pred_check
      _
    $region39: #{tpu_custom_call.1} parent=1 // pred_check_branch
      %87 = sbr.rel (0) target = $region41
    $region40: #{tpu_custom_call.1} parent=1 // pred_region
      %88 = dma.done [#allocation9], 512
    $region41: #{tpu_custom_call.1} parent=1 // pred_fallthru
      _
    // Predicated region
    $region42: #{tpu_custom_call.1} parent=1 // pred_check
      _
    $region43: #{tpu_custom_call.1} parent=1 // pred_check_branch
      %90 = sbr.rel (0) target = $region45
    $region44: #{tpu_custom_call.1} parent=1 // pred_region
      %91 = dma.done [#allocation9], 512
    $region45: #{tpu_custom_call.1} parent=1 // pred_fallthru
      _
    %v92 = vld [vmem:[#allocation8] sm:$0xff]
    %v93 = vld [vmem:[#allocation8 + $0x8] sm:$0xff]
    %v94 = vld [vmem:[#allocation8 + $0x10] sm:$0xff]
    %v95 = vld [vmem:[#allocation8 + $0x18] sm:$0xff]
    %v96 = vld [vmem:[#allocation5] sm:$0xff]
    %v97 = vld [vmem:[#allocation7] sm:$0xff]
    %v98 = vld [vmem:[#allocation2] sm:$0xff]
    %vm99 = vcmask 261120
    %v101 = vsel %vm99, %v96, 0
    %103 = vmatprep.subr.mxu0 0.0
    %104 = vmatpush1.msra.mxu0 %v92
    %105 = vmatprep.subr.mxu0 0.0
    %106 = vmatpush1.msra.mxu0 %v93
    %107 = vmatprep.subr.mxu0 0.0
    %108 = vmatpush1.msra.mxu0 %v94
    %109 = vmatprep.subr.mxu0 0.0
    %110 = vmatpush1.msra.mxu0 %v95
    %111 = vmatprep.subr.mxu0 0.0
    %112 = vmatpush1.msra.mxu0 0.0
    %113 = vmatprep.subr.mxu0 0.0
    %114 = vmatpush1.msra.mxu0 0.0
    %115 = vmatprep.subr.mxu0 0.0
    %116 = vmatpush1.msra.mxu0 0.0
    %117 = vmatprep.subr.mxu0 0.0
    %118 = vmatpush1.msra.mxu0 0.0
    %119 = vmatprep.subr.mxu0 0.0
    %120 = vmatpush1.msra.mxu0 0.0
    %121 = vmatprep.subr.mxu0 0.0
    %122 = vmatpush1.msra.mxu0 0.0
    %123 = vmatprep.subr.mxu0 0.0
    %124 = vmatpush1.msra.mxu0 0.0
    %125 = vmatprep.subr.mxu0 0.0
    %126 = vmatpush1.msra.mxu0 0.0
    %127 = vmatprep.subr.mxu0 0.0
    %128 = vmatpush1.msra.mxu0 0.0
    %129 = vmatprep.subr.mxu0 0.0
    %130 = vmatpush1.msra.mxu0 0.0
    %131 = vmatprep.subr.mxu0 0.0
    %132 = vmatpush1.msra.mxu0 0.0
    %133 = vmatprep.subr.mxu0 0.0
    %134 = vmatpush1.msra.mxu0 0.0
    %135 = vmatprep.subr.mxu0 0.0
    %136 = vmatpush1.msra.mxu0 0.0
    %137 = vmatprep.subr.mxu0 0.0
    %138 = vmatpush1.msra.mxu0 0.0
    %139 = vmatprep.subr.mxu0 0.0
    %140 = vmatpush1.msra.mxu0 0.0
    %141 = vmatprep.subr.mxu0 0.0
    %142 = vmatpush1.msra.mxu0 0.0
    %143 = vmatprep.subr.mxu0 0.0
    %144 = vmatpush1.msra.mxu0 0.0
    %145 = vmatprep.subr.mxu0 0.0
    %146 = vmatpush1.msra.mxu0 0.0
    %147 = vmatprep.subr.mxu0 0.0
    %148 = vmatpush1.msra.mxu0 0.0
    %149 = vmatprep.subr.mxu0 0.0
    %150 = vmatpush1.msra.mxu0 0.0
    %151 = vmatprep.subr.mxu0 0.0
    %152 = vmatpush1.msra.mxu0 0.0
    %153 = vmatprep.subr.mxu0 0.0
    %154 = vmatpush1.msra.mxu0 0.0
    %155 = vmatprep.subr.mxu0 0.0
    %156 = vmatpush1.msra.mxu0 0.0
    %157 = vmatprep.subr.mxu0 0.0
    %158 = vmatpush1.msra.mxu0 0.0
    %159 = vmatprep.subr.mxu0 0.0
    %160 = vmatpush1.msra.mxu0 0.0
    %161 = vmatprep.subr.mxu0 0.0
    %162 = vmatpush1.msra.mxu0 0.0
    %163 = vmatprep.subr.mxu0 0.0
    %164 = vmatpush1.msra.mxu0 0.0
    %165 = vmatprep.subr.mxu0 0.0
    %166 = vmatpush1.msra.mxu0 0.0
    %167 = vmatprep.mubr.f32.mxu0 0.0
    %168 = vmatmul.mubr.f32.gmra.mrb[0].mxu0 %v101
    %v169 = vpop.f32.mrb[0].mxu0
    %v170 = vadd.f32 0.0, %v169
    %v171 = vpop.f32.mrb[0].mxu0
    %172 = vdwg.mxu0
    %v173 = vadd.f32 %v98, %v170
    %v174 = vxor.u32 %v173, 2147483648
    %v175 = vmul.f32 %v174, 1.442695
    %v176 = vpow.pop %v175
    %v177 = vadd.f32 %v176, 1.0
    %v178 = vrcp.pop %v177
    %v179 = vmul.f32 1.0, %v178
    %v180 = vtanh.pop %v173
    %182 = vrot.lane.b32.xlu0 %v97, 32
    %v183 = vpop.permute.xlu0 %182
    %v185 = vmul.f32 %v179, %v183
    %187 = vrot.lane.b32.xlu0 %v180, 32
    %v188 = vpop.permute.xlu0 %187
    %v190 = vmul.f32 %v179, %v188
    %192 = vrot.lane.b32.xlu0 %v190, 32
    %v193 = vpop.permute.xlu0 %192
    %v195 = vadd.f32 %v185, %v193
    %v196 = vtanh.pop %v195
    %198 = vrot.lane.b32.xlu0 %v196, 32
    %v199 = vpop.permute.xlu0 %198
    %v201 = vmul.f32 %v179, %v199
    %s202 = scalar_lea.vmem [#allocation2], 8
    %v203 = vld [vmem:[%s202] sm:$0xff]
    %205 = vrot.lane.b32.xlu0 %v201, 64
    %v206 = vpop.permute.xlu0 %205
    %v207 = vsel %vm99, %v206, 0
    %209 = vmatprep.subr.mxu0 0.0
    %210 = vmatpush1.msra.mxu0 %v92
    %211 = vmatprep.subr.mxu0 0.0
    %212 = vmatpush1.msra.mxu0 %v93
    %213 = vmatprep.subr.mxu0 0.0
    %214 = vmatpush1.msra.mxu0 %v94
    %215 = vmatprep.subr.mxu0 0.0
    %216 = vmatpush1.msra.mxu0 %v95
    %217 = vmatprep.subr.mxu0 0.0
    %218 = vmatpush1.msra.mxu0 0.0
    %219 = vmatprep.subr.mxu0 0.0
    %220 = vmatpush1.msra.mxu0 0.0
    %221 = vmatprep.subr.mxu0 0.0
    %222 = vmatpush1.msra.mxu0 0.0
    %223 = vmatprep.subr.mxu0 0.0
    %224 = vmatpush1.msra.mxu0 0.0
    %225 = vmatprep.subr.mxu0 0.0
    %226 = vmatpush1.msra.mxu0 0.0
    %227 = vmatprep.subr.mxu0 0.0
    %228 = vmatpush1.msra.mxu0 0.0
    %229 = vmatprep.subr.mxu0 0.0
    %230 = vmatpush1.msra.mxu0 0.0
    %231 = vmatprep.subr.mxu0 0.0
    %232 = vmatpush1.msra.mxu0 0.0
    %233 = vmatprep.subr.mxu0 0.0
    %234 = vmatpush1.msra.mxu0 0.0
    %235 = vmatprep.subr.mxu0 0.0
    %236 = vmatpush1.msra.mxu0 0.0
    %237 = vmatprep.subr.mxu0 0.0
    %238 = vmatpush1.msra.mxu0 0.0
    %239 = vmatprep.subr.mxu0 0.0
    %240 = vmatpush1.msra.mxu0 0.0
    %241 = vmatprep.subr.mxu0 0.0
    %242 = vmatpush1.msra.mxu0 0.0
    %243 = vmatprep.subr.mxu0 0.0
    %244 = vmatpush1.msra.mxu0 0.0
    %245 = vmatprep.subr.mxu0 0.0
    %246 = vmatpush1.msra.mxu0 0.0
    %247 = vmatprep.subr.mxu0 0.0
    %248 = vmatpush1.msra.mxu0 0.0
    %249 = vmatprep.subr.mxu0 0.0
    %250 = vmatpush1.msra.mxu0 0.0
    %251 = vmatprep.subr.mxu0 0.0
    %252 = vmatpush1.msra.mxu0 0.0
    %253 = vmatprep.subr.mxu0 0.0
    %254 = vmatpush1.msra.mxu0 0.0
    %255 = vmatprep.subr.mxu0 0.0
    %256 = vmatpush1.msra.mxu0 0.0
    %257 = vmatprep.subr.mxu0 0.0
    %258 = vmatpush1.msra.mxu0 0.0
    %259 = vmatprep.subr.mxu0 0.0
    %260 = vmatpush1.msra.mxu0 0.0
    %261 = vmatprep.subr.mxu0 0.0
    %262 = vmatpush1.msra.mxu0 0.0
    %263 = vmatprep.subr.mxu0 0.0
    %264 = vmatpush1.msra.mxu0 0.0
    %265 = vmatprep.subr.mxu0 0.0
    %266 = vmatpush1.msra.mxu0 0.0
    %267 = vmatprep.subr.mxu0 0.0
    %268 = vmatpush1.msra.mxu0 0.0
    %269 = vmatprep.subr.mxu0 0.0
    %270 = vmatpush1.msra.mxu0 0.0
    %271 = vmatprep.subr.mxu0 0.0
    %272 = vmatpush1.msra.mxu0 0.0
    %273 = vmatprep.mubr.f32.mxu0 0.0
    %274 = vmatmul.mubr.f32.gmra.mrb[0].mxu0 %v207
    %v275 = vpop.f32.mrb[0].mxu0
    %v276 = vadd.f32 0.0, %v275
    %v277 = vpop.f32.mrb[0].mxu0
    %278 = vdwg.mxu0
    %v279 = vadd.f32 %v203, %v276
    %v280 = vxor.u32 %v279, 2147483648
    %v281 = vmul.f32 %v280, 1.442695
    %v282 = vpow.pop %v281
    %v283 = vadd.f32 %v282, 1.0
    %v284 = vrcp.pop %v283
    %v285 = vmul.f32 1.0, %v284
    %v286 = vtanh.pop %v279
    %v287 = vmul.f32 %v285, %v195
    %289 = vrot.lane.b32.xlu0 %v286, 32
    %v290 = vpop.permute.xlu0 %289
    %v292 = vmul.f32 %v285, %v290
    %294 = vrot.lane.b32.xlu0 %v292, 32
    %v295 = vpop.permute.xlu0 %294
    %v297 = vadd.f32 %v287, %v295
    %v298 = vtanh.pop %v297
    %300 = vrot.lane.b32.xlu0 %v298, 32
    %v301 = vpop.permute.xlu0 %300
    %v303 = vmul.f32 %v285, %v301
    %s304 = scalar_lea.vmem [#allocation2], 16
    %v305 = vld [vmem:[%s304] sm:$0xff]
    %307 = vrot.lane.b32.xlu0 %v303, 64
    %v308 = vpop.permute.xlu0 %307
    %v309 = vsel %vm99, %v308, 0
    %311 = vmatprep.subr.mxu0 0.0
    %312 = vmatpush1.msra.mxu0 %v92
    %313 = vmatprep.subr.mxu0 0.0
    %314 = vmatpush1.msra.mxu0 %v93
    %315 = vmatprep.subr.mxu0 0.0
    %316 = vmatpush1.msra.mxu0 %v94
    %317 = vmatprep.subr.mxu0 0.0
    %318 = vmatpush1.msra.mxu0 %v95
    %319 = vmatprep.subr.mxu0 0.0
    %320 = vmatpush1.msra.mxu0 0.0
    %321 = vmatprep.subr.mxu0 0.0
    %322 = vmatpush1.msra.mxu0 0.0
    %323 = vmatprep.subr.mxu0 0.0
    %324 = vmatpush1.msra.mxu0 0.0
    %325 = vmatprep.subr.mxu0 0.0
    %326 = vmatpush1.msra.mxu0 0.0
    %327 = vmatprep.subr.mxu0 0.0
    %328 = vmatpush1.msra.mxu0 0.0
    %329 = vmatprep.subr.mxu0 0.0
    %330 = vmatpush1.msra.mxu0 0.0
    %331 = vmatprep.subr.mxu0 0.0
    %332 = vmatpush1.msra.mxu0 0.0
    %333 = vmatprep.subr.mxu0 0.0
    %334 = vmatpush1.msra.mxu0 0.0
    %335 = vmatprep.subr.mxu0 0.0
    %336 = vmatpush1.msra.mxu0 0.0
    %337 = vmatprep.subr.mxu0 0.0
    %338 = vmatpush1.msra.mxu0 0.0
    %339 = vmatprep.subr.mxu0 0.0
    %340 = vmatpush1.msra.mxu0 0.0
    %341 = vmatprep.subr.mxu0 0.0
    %342 = vmatpush1.msra.mxu0 0.0
    %343 = vmatprep.subr.mxu0 0.0
    %344 = vmatpush1.msra.mxu0 0.0
    %345 = vmatprep.subr.mxu0 0.0
    %346 = vmatpush1.msra.mxu0 0.0
    %347 = vmatprep.subr.mxu0 0.0
    %348 = vmatpush1.msra.mxu0 0.0
    %349 = vmatprep.subr.mxu0 0.0
    %350 = vmatpush1.msra.mxu0 0.0
    %351 = vmatprep.subr.mxu0 0.0
    %352 = vmatpush1.msra.mxu0 0.0
    %353 = vmatprep.subr.mxu0 0.0
    %354 = vmatpush1.msra.mxu0 0.0
    %355 = vmatprep.subr.mxu0 0.0
    %356 = vmatpush1.msra.mxu0 0.0
    %357 = vmatprep.subr.mxu0 0.0
    %358 = vmatpush1.msra.mxu0 0.0
    %359 = vmatprep.subr.mxu0 0.0
    %360 = vmatpush1.msra.mxu0 0.0
    %361 = vmatprep.subr.mxu0 0.0
    %362 = vmatpush1.msra.mxu0 0.0
    %363 = vmatprep.subr.mxu0 0.0
    %364 = vmatpush1.msra.mxu0 0.0
    %365 = vmatprep.subr.mxu0 0.0
    %366 = vmatpush1.msra.mxu0 0.0
    %367 = vmatprep.subr.mxu0 0.0
    %368 = vmatpush1.msra.mxu0 0.0
    %369 = vmatprep.subr.mxu0 0.0
    %370 = vmatpush1.msra.mxu0 0.0
    %371 = vmatprep.subr.mxu0 0.0
    %372 = vmatpush1.msra.mxu0 0.0
    %373 = vmatprep.subr.mxu0 0.0
    %374 = vmatpush1.msra.mxu0 0.0
    %375 = vmatprep.mubr.f32.mxu0 0.0
    %376 = vmatmul.mubr.f32.gmra.mrb[0].mxu0 %v309
    %v377 = vpop.f32.mrb[0].mxu0
    %v378 = vadd.f32 0.0, %v377
    %v379 = vpop.f32.mrb[0].mxu0
    %380 = vdwg.mxu0
    %v381 = vadd.f32 %v305, %v378
    %v382 = vxor.u32 %v381, 2147483648
    %v383 = vmul.f32 %v382, 1.442695
    %v384 = vpow.pop %v383
    %v385 = vadd.f32 %v384, 1.0
    %v386 = vrcp.pop %v385
    %v387 = vmul.f32 1.0, %v386
    %v388 = vtanh.pop %v381
    %v389 = vmul.f32 %v387, %v297
    %391 = vrot.lane.b32.xlu0 %v388, 32
    %v392 = vpop.permute.xlu0 %391
    %v394 = vmul.f32 %v387, %v392
    %396 = vrot.lane.b32.xlu0 %v394, 32
    %v397 = vpop.permute.xlu0 %396
    %v399 = vadd.f32 %v389, %v397
    %v400 = vtanh.pop %v399
    %402 = vrot.lane.b32.xlu0 %v400, 32
    %v403 = vpop.permute.xlu0 %402
    %v405 = vmul.f32 %v387, %v403
    %s406 = scalar_lea.vmem [#allocation2], 24
    %v407 = vld [vmem:[%s406] sm:$0xff]
    %409 = vrot.lane.b32.xlu0 %v405, 64
    %v410 = vpop.permute.xlu0 %409
    %v411 = vsel %vm99, %v410, 0
    %413 = vmatprep.subr.mxu0 0.0
    %414 = vmatpush1.msra.mxu0 %v92
    %415 = vmatprep.subr.mxu0 0.0
    %416 = vmatpush1.msra.mxu0 %v93
    %417 = vmatprep.subr.mxu0 0.0
    %418 = vmatpush1.msra.mxu0 %v94
    %419 = vmatprep.subr.mxu0 0.0
    %420 = vmatpush1.msra.mxu0 %v95
    %421 = vmatprep.subr.mxu0 0.0
    %422 = vmatpush1.msra.mxu0 0.0
    %423 = vmatprep.subr.mxu0 0.0
    %424 = vmatpush1.msra.mxu0 0.0
    %425 = vmatprep.subr.mxu0 0.0
    %426 = vmatpush1.msra.mxu0 0.0
    %427 = vmatprep.subr.mxu0 0.0
    %428 = vmatpush1.msra.mxu0 0.0
    %429 = vmatprep.subr.mxu0 0.0
    %430 = vmatpush1.msra.mxu0 0.0
    %431 = vmatprep.subr.mxu0 0.0
    %432 = vmatpush1.msra.mxu0 0.0
    %433 = vmatprep.subr.mxu0 0.0
    %434 = vmatpush1.msra.mxu0 0.0
    %435 = vmatprep.subr.mxu0 0.0
    %436 = vmatpush1.msra.mxu0 0.0
    %437 = vmatprep.subr.mxu0 0.0
    %438 = vmatpush1.msra.mxu0 0.0
    %439 = vmatprep.subr.mxu0 0.0
    %440 = vmatpush1.msra.mxu0 0.0
    %441 = vmatprep.subr.mxu0 0.0
    %442 = vmatpush1.msra.mxu0 0.0
    %443 = vmatprep.subr.mxu0 0.0
    %444 = vmatpush1.msra.mxu0 0.0
    %445 = vmatprep.subr.mxu0 0.0
    %446 = vmatpush1.msra.mxu0 0.0
    %447 = vmatprep.subr.mxu0 0.0
    %448 = vmatpush1.msra.mxu0 0.0
    %449 = vmatprep.subr.mxu0 0.0
    %450 = vmatpush1.msra.mxu0 0.0
    %451 = vmatprep.subr.mxu0 0.0
    %452 = vmatpush1.msra.mxu0 0.0
    %453 = vmatprep.subr.mxu0 0.0
    %454 = vmatpush1.msra.mxu0 0.0
    %455 = vmatprep.subr.mxu0 0.0
    %456 = vmatpush1.msra.mxu0 0.0
    %457 = vmatprep.subr.mxu0 0.0
    %458 = vmatpush1.msra.mxu0 0.0
    %459 = vmatprep.subr.mxu0 0.0
    %460 = vmatpush1.msra.mxu0 0.0
    %461 = vmatprep.subr.mxu0 0.0
    %462 = vmatpush1.msra.mxu0 0.0
    %463 = vmatprep.subr.mxu0 0.0
    %464 = vmatpush1.msra.mxu0 0.0
    %465 = vmatprep.subr.mxu0 0.0
    %466 = vmatpush1.msra.mxu0 0.0
    %467 = vmatprep.subr.mxu0 0.0
    %468 = vmatpush1.msra.mxu0 0.0
    %469 = vmatprep.subr.mxu0 0.0
    %470 = vmatpush1.msra.mxu0 0.0
    %471 = vmatprep.subr.mxu0 0.0
    %472 = vmatpush1.msra.mxu0 0.0
    %473 = vmatprep.subr.mxu0 0.0
    %474 = vmatpush1.msra.mxu0 0.0
    %475 = vmatprep.subr.mxu0 0.0
    %476 = vmatpush1.msra.mxu0 0.0
    %477 = vmatprep.mubr.f32.mxu0 0.0
    %478 = vmatmul.mubr.f32.gmra.mrb[0].mxu0 %v411
    %v479 = vpop.f32.mrb[0].mxu0
    %v480 = vadd.f32 0.0, %v479
    %v481 = vpop.f32.mrb[0].mxu0
    %482 = vdwg.mxu0
    %v483 = vadd.f32 %v407, %v480
    %v484 = vxor.u32 %v483, 2147483648
    %v485 = vmul.f32 %v484, 1.442695
    %v486 = vpow.pop %v485
    %v487 = vadd.f32 %v486, 1.0
    %v488 = vrcp.pop %v487
    %v489 = vmul.f32 1.0, %v488
    %v490 = vtanh.pop %v483
    %v491 = vmul.f32 %v489, %v399
    %493 = vrot.lane.b32.xlu0 %v490, 32
    %v494 = vpop.permute.xlu0 %493
    %v496 = vmul.f32 %v489, %v494
    %498 = vrot.lane.b32.xlu0 %v496, 32
    %v499 = vpop.permute.xlu0 %498
    %v501 = vadd.f32 %v491, %v499
    %v502 = vtanh.pop %v501
    %504 = vrot.lane.b32.xlu0 %v502, 32
    %v505 = vpop.permute.xlu0 %504
    %v507 = vmul.f32 %v489, %v505
    %s508 = scalar_lea.vmem [#allocation2], 32
    %v509 = vld [vmem:[%s508] sm:$0xff]
    %511 = vrot.lane.b32.xlu0 %v507, 64
    %v512 = vpop.permute.xlu0 %511
    %v513 = vsel %vm99, %v512, 0
    %515 = vmatprep.subr.mxu0 0.0
    %516 = vmatpush1.msra.mxu0 %v92
    %517 = vmatprep.subr.mxu0 0.0
    %518 = vmatpush1.msra.mxu0 %v93
    %519 = vmatprep.subr.mxu0 0.0
    %520 = vmatpush1.msra.mxu0 %v94
    %521 = vmatprep.subr.mxu0 0.0
    %522 = vmatpush1.msra.mxu0 %v95
    %523 = vmatprep.subr.mxu0 0.0
    %524 = vmatpush1.msra.mxu0 0.0
    %525 = vmatprep.subr.mxu0 0.0
    %526 = vmatpush1.msra.mxu0 0.0
    %527 = vmatprep.subr.mxu0 0.0
    %528 = vmatpush1.msra.mxu0 0.0
    %529 = vmatprep.subr.mxu0 0.0
    %530 = vmatpush1.msra.mxu0 0.0
    %531 = vmatprep.subr.mxu0 0.0
    %532 = vmatpush1.msra.mxu0 0.0
    %533 = vmatprep.subr.mxu0 0.0
    %534 = vmatpush1.msra.mxu0 0.0
    %535 = vmatprep.subr.mxu0 0.0
    %536 = vmatpush1.msra.mxu0 0.0
    %537 = vmatprep.subr.mxu0 0.0
    %538 = vmatpush1.msra.mxu0 0.0
    %539 = vmatprep.subr.mxu0 0.0
    %540 = vmatpush1.msra.mxu0 0.0
    %541 = vmatprep.subr.mxu0 0.0
    %542 = vmatpush1.msra.mxu0 0.0
    %543 = vmatprep.subr.mxu0 0.0
    %544 = vmatpush1.msra.mxu0 0.0
    %545 = vmatprep.subr.mxu0 0.0
    %546 = vmatpush1.msra.mxu0 0.0
    %547 = vmatprep.subr.mxu0 0.0
    %548 = vmatpush1.msra.mxu0 0.0
    %549 = vmatprep.subr.mxu0 0.0
    %550 = vmatpush1.msra.mxu0 0.0
    %551 = vmatprep.subr.mxu0 0.0
    %552 = vmatpush1.msra.mxu0 0.0
    %553 = vmatprep.subr.mxu0 0.0
    %554 = vmatpush1.msra.mxu0 0.0
    %555 = vmatprep.subr.mxu0 0.0
    %556 = vmatpush1.msra.mxu0 0.0
    %557 = vmatprep.subr.mxu0 0.0
    %558 = vmatpush1.msra.mxu0 0.0
    %559 = vmatprep.subr.mxu0 0.0
    %560 = vmatpush1.msra.mxu0 0.0
    %561 = vmatprep.subr.mxu0 0.0
    %562 = vmatpush1.msra.mxu0 0.0
    %563 = vmatprep.subr.mxu0 0.0
    %564 = vmatpush1.msra.mxu0 0.0
    %565 = vmatprep.subr.mxu0 0.0
    %566 = vmatpush1.msra.mxu0 0.0
    %567 = vmatprep.subr.mxu0 0.0
    %568 = vmatpush1.msra.mxu0 0.0
    %569 = vmatprep.subr.mxu0 0.0
    %570 = vmatpush1.msra.mxu0 0.0
    %571 = vmatprep.subr.mxu0 0.0
    %572 = vmatpush1.msra.mxu0 0.0
    %573 = vmatprep.subr.mxu0 0.0
    %574 = vmatpush1.msra.mxu0 0.0
    %575 = vmatprep.subr.mxu0 0.0
    %576 = vmatpush1.msra.mxu0 0.0
    %577 = vmatprep.subr.mxu0 0.0
    %578 = vmatpush1.msra.mxu0 0.0
    %579 = vmatprep.mubr.f32.mxu0 0.0
    %580 = vmatmul.mubr.f32.gmra.mrb[0].mxu0 %v513
    %v581 = vpop.f32.mrb[0].mxu0
    %v582 = vadd.f32 0.0, %v581
    %v583 = vpop.f32.mrb[0].mxu0
    %584 = vdwg.mxu0
    %v585 = vadd.f32 %v509, %v582
    %v586 = vxor.u32 %v585, 2147483648
    %v587 = vmul.f32 %v586, 1.442695
    %v588 = vpow.pop %v587
    %v589 = vadd.f32 %v588, 1.0
    %v590 = vrcp.pop %v589
    %v591 = vmul.f32 1.0, %v590
    %v592 = vtanh.pop %v585
    %v593 = vmul.f32 %v591, %v501
    %595 = vrot.lane.b32.xlu0 %v592, 32
    %v596 = vpop.permute.xlu0 %595
    %v598 = vmul.f32 %v591, %v596
    %600 = vrot.lane.b32.xlu0 %v598, 32
    %v601 = vpop.permute.xlu0 %600
    %v603 = vadd.f32 %v593, %v601
    %v604 = vtanh.pop %v603
    %606 = vrot.lane.b32.xlu0 %v604, 32
    %v607 = vpop.permute.xlu0 %606
    %v609 = vmul.f32 %v591, %v607
    %s610 = scalar_lea.vmem [#allocation2], 40
    %v611 = vld [vmem:[%s610] sm:$0xff]
    %613 = vrot.lane.b32.xlu0 %v609, 64
    %v614 = vpop.permute.xlu0 %613
    %v615 = vsel %vm99, %v614, 0
    %617 = vmatprep.subr.mxu0 0.0
    %618 = vmatpush1.msra.mxu0 %v92
    %619 = vmatprep.subr.mxu0 0.0
    %620 = vmatpush1.msra.mxu0 %v93
    %621 = vmatprep.subr.mxu0 0.0
    %622 = vmatpush1.msra.mxu0 %v94
    %623 = vmatprep.subr.mxu0 0.0
    %624 = vmatpush1.msra.mxu0 %v95
    %625 = vmatprep.subr.mxu0 0.0
    %626 = vmatpush1.msra.mxu0 0.0
    %627 = vmatprep.subr.mxu0 0.0
    %628 = vmatpush1.msra.mxu0 0.0
    %629 = vmatprep.subr.mxu0 0.0
    %630 = vmatpush1.msra.mxu0 0.0
    %631 = vmatprep.subr.mxu0 0.0
    %632 = vmatpush1.msra.mxu0 0.0
    %633 = vmatprep.subr.mxu0 0.0
    %634 = vmatpush1.msra.mxu0 0.0
    %635 = vmatprep.subr.mxu0 0.0
    %636 = vmatpush1.msra.mxu0 0.0
    %637 = vmatprep.subr.mxu0 0.0
    %638 = vmatpush1.msra.mxu0 0.0
    %639 = vmatprep.subr.mxu0 0.0
    %640 = vmatpush1.msra.mxu0 0.0
    %641 = vmatprep.subr.mxu0 0.0
    %642 = vmatpush1.msra.mxu0 0.0
    %643 = vmatprep.subr.mxu0 0.0
    %644 = vmatpush1.msra.mxu0 0.0
    %645 = vmatprep.subr.mxu0 0.0
    %646 = vmatpush1.msra.mxu0 0.0
    %647 = vmatprep.subr.mxu0 0.0
    %648 = vmatpush1.msra.mxu0 0.0
    %649 = vmatprep.subr.mxu0 0.0
    %650 = vmatpush1.msra.mxu0 0.0
    %651 = vmatprep.subr.mxu0 0.0
    %652 = vmatpush1.msra.mxu0 0.0
    %653 = vmatprep.subr.mxu0 0.0
    %654 = vmatpush1.msra.mxu0 0.0
    %655 = vmatprep.subr.mxu0 0.0
    %656 = vmatpush1.msra.mxu0 0.0
    %657 = vmatprep.subr.mxu0 0.0
    %658 = vmatpush1.msra.mxu0 0.0
    %659 = vmatprep.subr.mxu0 0.0
    %660 = vmatpush1.msra.mxu0 0.0
    %661 = vmatprep.subr.mxu0 0.0
    %662 = vmatpush1.msra.mxu0 0.0
    %663 = vmatprep.subr.mxu0 0.0
    %664 = vmatpush1.msra.mxu0 0.0
    %665 = vmatprep.subr.mxu0 0.0
    %666 = vmatpush1.msra.mxu0 0.0
    %667 = vmatprep.subr.mxu0 0.0
    %668 = vmatpush1.msra.mxu0 0.0
    %669 = vmatprep.subr.mxu0 0.0
    %670 = vmatpush1.msra.mxu0 0.0
    %671 = vmatprep.subr.mxu0 0.0
    %672 = vmatpush1.msra.mxu0 0.0
    %673 = vmatprep.subr.mxu0 0.0
    %674 = vmatpush1.msra.mxu0 0.0
    %675 = vmatprep.subr.mxu0 0.0
    %676 = vmatpush1.msra.mxu0 0.0
    %677 = vmatprep.subr.mxu0 0.0
    %678 = vmatpush1.msra.mxu0 0.0
    %679 = vmatprep.subr.mxu0 0.0
    %680 = vmatpush1.msra.mxu0 0.0
    %681 = vmatprep.mubr.f32.mxu0 0.0
    %682 = vmatmul.mubr.f32.gmra.mrb[0].mxu0 %v615
    %v683 = vpop.f32.mrb[0].mxu0
    %v684 = vadd.f32 0.0, %v683
    %v685 = vpop.f32.mrb[0].mxu0
    %686 = vdwg.mxu0
    %v687 = vadd.f32 %v611, %v684
    %v688 = vxor.u32 %v687, 2147483648
    %v689 = vmul.f32 %v688, 1.442695
    %v690 = vpow.pop %v689
    %v691 = vadd.f32 %v690, 1.0
    %v692 = vrcp.pop %v691
    %v693 = vmul.f32 1.0, %v692
    %v694 = vtanh.pop %v687
    %v695 = vmul.f32 %v693, %v603
    %697 = vrot.lane.b32.xlu0 %v694, 32
    %v698 = vpop.permute.xlu0 %697
    %v700 = vmul.f32 %v693, %v698
    %702 = vrot.lane.b32.xlu0 %v700, 32
    %v703 = vpop.permute.xlu0 %702
    %v705 = vadd.f32 %v695, %v703
    %v706 = vtanh.pop %v705
    %708 = vrot.lane.b32.xlu0 %v706, 32
    %v709 = vpop.permute.xlu0 %708
    %v711 = vmul.f32 %v693, %v709
    %s712 = scalar_lea.vmem [#allocation2], 48
    %v713 = vld [vmem:[%s712] sm:$0xff]
    %715 = vrot.lane.b32.xlu0 %v711, 64
    %v716 = vpop.permute.xlu0 %715
    %v717 = vsel %vm99, %v716, 0
    %719 = vmatprep.subr.mxu0 0.0
    %720 = vmatpush1.msra.mxu0 %v92
    %721 = vmatprep.subr.mxu0 0.0
    %722 = vmatpush1.msra.mxu0 %v93
    %723 = vmatprep.subr.mxu0 0.0
    %724 = vmatpush1.msra.mxu0 %v94
    %725 = vmatprep.subr.mxu0 0.0
    %726 = vmatpush1.msra.mxu0 %v95
    %727 = vmatprep.subr.mxu0 0.0
    %728 = vmatpush1.msra.mxu0 0.0
    %729 = vmatprep.subr.mxu0 0.0
    %730 = vmatpush1.msra.mxu0 0.0
    %731 = vmatprep.subr.mxu0 0.0
    %732 = vmatpush1.msra.mxu0 0.0
    %733 = vmatprep.subr.mxu0 0.0
    %734 = vmatpush1.msra.mxu0 0.0
    %735 = vmatprep.subr.mxu0 0.0
    %736 = vmatpush1.msra.mxu0 0.0
    %737 = vmatprep.subr.mxu0 0.0
    %738 = vmatpush1.msra.mxu0 0.0
    %739 = vmatprep.subr.mxu0 0.0
    %740 = vmatpush1.msra.mxu0 0.0
    %741 = vmatprep.subr.mxu0 0.0
    %742 = vmatpush1.msra.mxu0 0.0
    %743 = vmatprep.subr.mxu0 0.0
    %744 = vmatpush1.msra.mxu0 0.0
    %745 = vmatprep.subr.mxu0 0.0
    %746 = vmatpush1.msra.mxu0 0.0
    %747 = vmatprep.subr.mxu0 0.0
    %748 = vmatpush1.msra.mxu0 0.0
    %749 = vmatprep.subr.mxu0 0.0
    %750 = vmatpush1.msra.mxu0 0.0
    %751 = vmatprep.subr.mxu0 0.0
    %752 = vmatpush1.msra.mxu0 0.0
    %753 = vmatprep.subr.mxu0 0.0
    %754 = vmatpush1.msra.mxu0 0.0
    %755 = vmatprep.subr.mxu0 0.0
    %756 = vmatpush1.msra.mxu0 0.0
    %757 = vmatprep.subr.mxu0 0.0
    %758 = vmatpush1.msra.mxu0 0.0
    %759 = vmatprep.subr.mxu0 0.0
    %760 = vmatpush1.msra.mxu0 0.0
    %761 = vmatprep.subr.mxu0 0.0
    %762 = vmatpush1.msra.mxu0 0.0
    %763 = vmatprep.subr.mxu0 0.0
    %764 = vmatpush1.msra.mxu0 0.0
    %765 = vmatprep.subr.mxu0 0.0
    %766 = vmatpush1.msra.mxu0 0.0
    %767 = vmatprep.subr.mxu0 0.0
    %768 = vmatpush1.msra.mxu0 0.0
    %769 = vmatprep.subr.mxu0 0.0
    %770 = vmatpush1.msra.mxu0 0.0
    %771 = vmatprep.subr.mxu0 0.0
    %772 = vmatpush1.msra.mxu0 0.0
    %773 = vmatprep.subr.mxu0 0.0
    %774 = vmatpush1.msra.mxu0 0.0
    %775 = vmatprep.subr.mxu0 0.0
    %776 = vmatpush1.msra.mxu0 0.0
    %777 = vmatprep.subr.mxu0 0.0
    %778 = vmatpush1.msra.mxu0 0.0
    %779 = vmatprep.subr.mxu0 0.0
    %780 = vmatpush1.msra.mxu0 0.0
    %781 = vmatprep.subr.mxu0 0.0
    %782 = vmatpush1.msra.mxu0 0.0
    %783 = vmatprep.mubr.f32.mxu0 0.0
    %784 = vmatmul.mubr.f32.gmra.mrb[0].mxu0 %v717
    %v785 = vpop.f32.mrb[0].mxu0
    %v786 = vadd.f32 0.0, %v785
    %v787 = vpop.f32.mrb[0].mxu0
    %788 = vdwg.mxu0
    %v789 = vadd.f32 %v713, %v786
    %v790 = vxor.u32 %v789, 2147483648
    %v791 = vmul.f32 %v790, 1.442695
    %v792 = vpow.pop %v791
    %v793 = vadd.f32 %v792, 1.0
    %v794 = vrcp.pop %v793
    %v795 = vmul.f32 1.0, %v794
    %v796 = vtanh.pop %v789
    %v797 = vmul.f32 %v795, %v705
    %799 = vrot.lane.b32.xlu0 %v796, 32
    %v800 = vpop.permute.xlu0 %799
    %v802 = vmul.f32 %v795, %v800
    %804 = vrot.lane.b32.xlu0 %v802, 32
    %v805 = vpop.permute.xlu0 %804
    %v807 = vadd.f32 %v797, %v805
    %v808 = vtanh.pop %v807
    %810 = vrot.lane.b32.xlu0 %v808, 32
    %v811 = vpop.permute.xlu0 %810
    %v813 = vmul.f32 %v795, %v811
    %s814 = scalar_lea.vmem [#allocation2], 56
    %v815 = vld [vmem:[%s814] sm:$0xff]
    %817 = vrot.lane.b32.xlu0 %v813, 64
    %v818 = vpop.permute.xlu0 %817
    %v819 = vsel %vm99, %v818, 0
    %821 = vmatprep.subr.mxu0 0.0
    %822 = vmatpush1.msra.mxu0 %v92
    %823 = vmatprep.subr.mxu0 0.0
    %824 = vmatpush1.msra.mxu0 %v93
    %825 = vmatprep.subr.mxu0 0.0
    %826 = vmatpush1.msra.mxu0 %v94
    %827 = vmatprep.subr.mxu0 0.0
    %828 = vmatpush1.msra.mxu0 %v95
    %829 = vmatprep.subr.mxu0 0.0
    %830 = vmatpush1.msra.mxu0 0.0
    %831 = vmatprep.subr.mxu0 0.0
    %832 = vmatpush1.msra.mxu0 0.0
    %833 = vmatprep.subr.mxu0 0.0
    %834 = vmatpush1.msra.mxu0 0.0
    %835 = vmatprep.subr.mxu0 0.0
    %836 = vmatpush1.msra.mxu0 0.0
    %837 = vmatprep.subr.mxu0 0.0
    %838 = vmatpush1.msra.mxu0 0.0
    %839 = vmatprep.subr.mxu0 0.0
    %840 = vmatpush1.msra.mxu0 0.0
    %841 = vmatprep.subr.mxu0 0.0
    %842 = vmatpush1.msra.mxu0 0.0
    %843 = vmatprep.subr.mxu0 0.0
    %844 = vmatpush1.msra.mxu0 0.0
    %845 = vmatprep.subr.mxu0 0.0
    %846 = vmatpush1.msra.mxu0 0.0
    %847 = vmatprep.subr.mxu0 0.0
    %848 = vmatpush1.msra.mxu0 0.0
    %849 = vmatprep.subr.mxu0 0.0
    %850 = vmatpush1.msra.mxu0 0.0
    %851 = vmatprep.subr.mxu0 0.0
    %852 = vmatpush1.msra.mxu0 0.0
    %853 = vmatprep.subr.mxu0 0.0
    %854 = vmatpush1.msra.mxu0 0.0
    %855 = vmatprep.subr.mxu0 0.0
    %856 = vmatpush1.msra.mxu0 0.0
    %857 = vmatprep.subr.mxu0 0.0
    %858 = vmatpush1.msra.mxu0 0.0
    %859 = vmatprep.subr.mxu0 0.0
    %860 = vmatpush1.msra.mxu0 0.0
    %861 = vmatprep.subr.mxu0 0.0
    %862 = vmatpush1.msra.mxu0 0.0
    %863 = vmatprep.subr.mxu0 0.0
    %864 = vmatpush1.msra.mxu0 0.0
    %865 = vmatprep.subr.mxu0 0.0
    %866 = vmatpush1.msra.mxu0 0.0
    %867 = vmatprep.subr.mxu0 0.0
    %868 = vmatpush1.msra.mxu0 0.0
    %869 = vmatprep.subr.mxu0 0.0
    %870 = vmatpush1.msra.mxu0 0.0
    %871 = vmatprep.subr.mxu0 0.0
    %872 = vmatpush1.msra.mxu0 0.0
    %873 = vmatprep.subr.mxu0 0.0
    %874 = vmatpush1.msra.mxu0 0.0
    %875 = vmatprep.subr.mxu0 0.0
    %876 = vmatpush1.msra.mxu0 0.0
    %877 = vmatprep.subr.mxu0 0.0
    %878 = vmatpush1.msra.mxu0 0.0
    %879 = vmatprep.subr.mxu0 0.0
    %880 = vmatpush1.msra.mxu0 0.0
    %881 = vmatprep.subr.mxu0 0.0
    %882 = vmatpush1.msra.mxu0 0.0
    %883 = vmatprep.subr.mxu0 0.0
    %884 = vmatpush1.msra.mxu0 0.0
    %885 = vmatprep.mubr.f32.mxu0 0.0
    %886 = vmatmul.mubr.f32.gmra.mrb[0].mxu0 %v819
    %v887 = vpop.f32.mrb[0].mxu0
    %v888 = vadd.f32 0.0, %v887
    %v889 = vpop.f32.mrb[0].mxu0
    %890 = vdwg.mxu0
    %v891 = vadd.f32 %v815, %v888
    %v892 = vxor.u32 %v891, 2147483648
    %v893 = vmul.f32 %v892, 1.442695
    %v894 = vpow.pop %v893
    %v895 = vadd.f32 %v894, 1.0
    %v896 = vrcp.pop %v895
    %v897 = vmul.f32 1.0, %v896
    %v898 = vtanh.pop %v891
    %v899 = vmul.f32 %v897, %v807
    %901 = vrot.lane.b32.xlu0 %v898, 32
    %v902 = vpop.permute.xlu0 %901
    %v904 = vmul.f32 %v897, %v902
    %906 = vrot.lane.b32.xlu0 %v904, 32
    %v907 = vpop.permute.xlu0 %906
    %v909 = vadd.f32 %v899, %v907
    %v910 = vtanh.pop %v909
    %912 = vrot.lane.b32.xlu0 %v910, 32
    %v913 = vpop.permute.xlu0 %912
    %v915 = vmul.f32 %v897, %v913
    %917 = vrot.lane.b32.xlu0 %v915, 64
    %v918 = vpop.permute.xlu0 %917
    %920 = vst.msk [vmem:[#allocation12] sm:$0xff] %vm99, %v918
    %922 = vrot.lane.b32.xlu0 %v909, 96
    %v923 = vpop.permute.xlu0 %922
    %925 = vst.msk [vmem:[#allocation14] sm:$0xff] %vm99, %v923
    %v926 = vld [vmem:[#allocation10] sm:$0xff]
    %v927 = vld [vmem:[#allocation10 + $0x8] sm:$0xff]
    %v928 = vld [vmem:[#allocation10 + $0x10] sm:$0xff]
    %v929 = vld [vmem:[#allocation10 + $0x18] sm:$0xff]
    %v930 = vld [vmem:[%s5] sm:$0x1]
    %v932 = vlaneseq
    %v933 = vshrl.u32 %v932, 7
    %v934 = vsub.s32 0, %v933
    %v935 = vrot.slane %v930, %v934
    %v937 = vsel %vm99, %v918, 0
    %939 = vmatprep.subr.mxu0 0.0
    %940 = vmatpush1.msra.mxu0 %v926
    %941 = vmatprep.subr.mxu0 0.0
    %942 = vmatpush1.msra.mxu0 %v927
    %943 = vmatprep.subr.mxu0 0.0
    %944 = vmatpush1.msra.mxu0 %v928
    %945 = vmatprep.subr.mxu0 0.0
    %946 = vmatpush1.msra.mxu0 %v929
    %947 = vmatprep.subr.mxu0 0.0
    %948 = vmatpush1.msra.mxu0 0.0
    %949 = vmatprep.subr.mxu0 0.0
    %950 = vmatpush1.msra.mxu0 0.0
    %951 = vmatprep.subr.mxu0 0.0
    %952 = vmatpush1.msra.mxu0 0.0
    %953 = vmatprep.subr.mxu0 0.0
    %954 = vmatpush1.msra.mxu0 0.0
    %955 = vmatprep.subr.mxu0 0.0
    %956 = vmatpush1.msra.mxu0 0.0
    %957 = vmatprep.subr.mxu0 0.0
    %958 = vmatpush1.msra.mxu0 0.0
    %959 = vmatprep.subr.mxu0 0.0
    %960 = vmatpush1.msra.mxu0 0.0
    %961 = vmatprep.subr.mxu0 0.0
    %962 = vmatpush1.msra.mxu0 0.0
    %963 = vmatprep.subr.mxu0 0.0
    %964 = vmatpush1.msra.mxu0 0.0
    %965 = vmatprep.subr.mxu0 0.0
    %966 = vmatpush1.msra.mxu0 0.0
    %967 = vmatprep.subr.mxu0 0.0
    %968 = vmatpush1.msra.mxu0 0.0
    %969 = vmatprep.subr.mxu0 0.0
    %970 = vmatpush1.msra.mxu0 0.0
    %971 = vmatprep.subr.mxu0 0.0
    %972 = vmatpush1.msra.mxu0 0.0
    %973 = vmatprep.subr.mxu0 0.0
    %974 = vmatpush1.msra.mxu0 0.0
    %975 = vmatprep.subr.mxu0 0.0
    %976 = vmatpush1.msra.mxu0 0.0
    %977 = vmatprep.subr.mxu0 0.0
    %978 = vmatpush1.msra.mxu0 0.0
    %979 = vmatprep.subr.mxu0 0.0
    %980 = vmatpush1.msra.mxu0 0.0
    %981 = vmatprep.subr.mxu0 0.0
    %982 = vmatpush1.msra.mxu0 0.0
    %983 = vmatprep.subr.mxu0 0.0
    %984 = vmatpush1.msra.mxu0 0.0
    %985 = vmatprep.subr.mxu0 0.0
    %986 = vmatpush1.msra.mxu0 0.0
    %987 = vmatprep.subr.mxu0 0.0
    %988 = vmatpush1.msra.mxu0 0.0
    %989 = vmatprep.subr.mxu0 0.0
    %990 = vmatpush1.msra.mxu0 0.0
    %991 = vmatprep.subr.mxu0 0.0
    %992 = vmatpush1.msra.mxu0 0.0
    %993 = vmatprep.subr.mxu0 0.0
    %994 = vmatpush1.msra.mxu0 0.0
    %995 = vmatprep.subr.mxu0 0.0
    %996 = vmatpush1.msra.mxu0 0.0
    %997 = vmatprep.subr.mxu0 0.0
    %998 = vmatpush1.msra.mxu0 0.0
    %999 = vmatprep.subr.mxu0 0.0
    %1000 = vmatpush1.msra.mxu0 0.0
    %1001 = vmatprep.subr.mxu0 0.0
    %1002 = vmatpush1.msra.mxu0 0.0
    %1003 = vmatprep.mubr.f32.mxu0 0.0
    %1004 = vmatmul.mubr.f32.gmra.mrb[0].mxu0 %v937
    %v1005 = vpop.f32.mrb[0].mxu0
    %v1006 = vadd.f32 %v935, %v1005
    %v1007 = vpop.f32.mrb[0].mxu0
    %1008 = vdwg.mxu0
    %1009 = vst [vmem:[#allocation11] sm:$0xff] %v1006
    // Predicated region
    $region46: #{tpu_custom_call.1} parent=1 // pred_check
      _
    $region47: #{tpu_custom_call.1} parent=1 // pred_check_branch
      %1011 = sbr.rel (0) target = $region49
    $region48: #{tpu_custom_call.1} parent=1 // pred_region
      %s1013 = ssub.s32 128, 128
      %1014 = vsyncadd [#allocation4], %s1013
      %s1016 = sshll.u32 [#allocation11], 4
      %s1017 = int_to_ptr.vmem [resolvable:$true] %s1016
      %1019 = dma.vmem_to_hbm [thread:$0]  %s1017, 128, %s6, [#allocation4]
    $region49: #{tpu_custom_call.1} parent=1 // pred_fallthru
      _
    // Predicated region
    $region50: #{tpu_custom_call.1} parent=1 // pred_check
      _
    $region51: #{tpu_custom_call.1} parent=1 // pred_check_branch
      %1021 = sbr.rel (0) target = $region53
    $region52: #{tpu_custom_call.1} parent=1 // pred_region
      %s1023 = ssub.s32 128, 128
      %1024 = vsyncadd [#allocation13], %s1023
      %s1026 = sshll.u32 [#allocation12], 4
      %s1027 = int_to_ptr.vmem [resolvable:$true] %s1026
      %1029 = dma.vmem_to_hbm [thread:$0]  %s1027, 128, %s7, [#allocation13]
    $region53: #{tpu_custom_call.1} parent=1 // pred_fallthru
      _
    // Predicated region
    $region54: #{tpu_custom_call.1} parent=1 // pred_check
      _
    $region55: #{tpu_custom_call.1} parent=1 // pred_check_branch
      %1031 = sbr.rel (0) target = $region57
    $region56: #{tpu_custom_call.1} parent=1 // pred_region
      %s1033 = ssub.s32 128, 128
      %1034 = vsyncadd [#allocation13], %s1033
      %s1036 = sshll.u32 [#allocation14], 4
      %s1037 = int_to_ptr.vmem [resolvable:$true] %s1036
      %1039 = dma.vmem_to_hbm [thread:$0]  %s1037, 128, %s8, [#allocation13]
    $region57: #{tpu_custom_call.1} parent=1 // pred_fallthru
      _
    // Predicated region
    $region58: #{tpu_custom_call.1} parent=1 // pred_check
      _
    $region59: #{tpu_custom_call.1} parent=1 // pred_check_branch
      %1041 = sbr.rel (0) target = $region61
    $region60: #{tpu_custom_call.1} parent=1 // pred_region
      %1042 = dma.done [#allocation4], 128
    $region61: #{tpu_custom_call.1} parent=1 // pred_fallthru
      _
    // Predicated region
    $region62: #{tpu_custom_call.1} parent=1 // pred_check
      _
    $region63: #{tpu_custom_call.1} parent=1 // pred_check_branch
      %1044 = sbr.rel (0) target = $region65
    $region64: #{tpu_custom_call.1} parent=1 // pred_region
      %1045 = dma.done [#allocation13], 128
    $region65: #{tpu_custom_call.1} parent=1 // pred_fallthru
      _
    // Predicated region
    $region66: #{tpu_custom_call.1} parent=1 // pred_check
      _
    $region67: #{tpu_custom_call.1} parent=1 // pred_check_branch
      %1047 = sbr.rel (0) target = $region69
    $region68: #{tpu_custom_call.1} parent=1 // pred_region
      %1048 = dma.done [#allocation13], 128
    $region69: #{tpu_custom_call.1} parent=1 // pred_fallthru
      _
    %1049 = vsyncpa [#allocation3], 1
    %1050 = vsyncpa [#allocation6], 1
    %1051 = vsyncpa [#allocation9], 1
    %1052 = vsyncpa [#allocation4], 1
    %1053 = vsyncpa [#allocation13], 1

</llo_original>
